<compile_context>
chip_gen: v5e
topology: v5e:2x2
jax: 0.10.0
libtpu: 0.0.40
codegen_flags: <defaults>
</compile_context>

<pallas_src>
import jax
import jax.numpy as jnp
from jax.experimental import pallas as pl
from jax.experimental.pallas import tpu as pltpu

IGNORE_INDEX = -100


def _fused_ce_kernel(ids_ref, tgt_ref, table_ref, w_ref, b_ref, psum_ref):
    """One M-tile of fused (embed -> logits -> masked CE partial sum).

    ids_ref   : (TM, 1)  i32   input token ids (xi); padded rows arbitrary
    tgt_ref   : (TM, 1)  i32   target token ids (xo); padded rows = -100
    table_ref : (V, D)   bf16  embedding table (resident)
    w_ref     : (D, V)   bf16  output projection weight (resident)
    b_ref     : (1, V)   f32   output projection bias (resident)
    psum_ref  : (1, 8, 128) f32  lane-dense per-tile partial loss sum
    """
    V = table_ref.shape[0]
    ids = ids_ref[...]                                          # (TM, 1)
    tgt = tgt_ref[...]                                          # (TM, 1)
    col = jax.lax.broadcasted_iota(jnp.int32, (1, V), 1)        # (1, V)

    # Embedding gather fused as a one-hot matmul on the MXU (small vocab).
    # TODO(synk): for realistic vocab sizes switch to scalar-prefetch row
    # gather plus online-softmax over a tiled V grid axis.
    onehot = (col == ids).astype(jnp.bfloat16)                  # (TM, V)
    emb = jnp.dot(onehot, table_ref[...],
                  preferred_element_type=jnp.float32)           # (TM, D) f32
    logits = jnp.dot(emb.astype(jnp.bfloat16), w_ref[...],
                     preferred_element_type=jnp.float32)        # (TM, V) f32
    logits = logits + b_ref[...]

    # Numerically stable CE on shifted logits; row_max cancels in lse - picked.
    row_max = jnp.max(logits, axis=-1, keepdims=True)           # (TM, 1)
    shifted = logits - row_max                                  # (TM, V)
    lse_sh = jnp.log(jnp.sum(jnp.exp(shifted), axis=-1, keepdims=True))
    picked_sh = jnp.sum(jnp.where(col == tgt, shifted, 0.0),
                        axis=-1, keepdims=True)                 # (TM, 1)

    # NOTE: out-of-range targets (other than -100) silently contribute a
    # wrong (picked == 0) loss, unlike torch which raises.  Documented caveat.
    valid = (tgt != IGNORE_INDEX)
    per_row = jnp.where(valid, lse_sh - picked_sh, 0.0)         # (TM, 1)
    psum_ref[...] = jnp.full(psum_ref.shape, jnp.sum(per_row), jnp.float32)


def _cross_entropy_loss_sum_pallas(ids, tgt, table_bf16, w_bf16, b_f32,
                                   ignore_index=IGNORE_INDEX):
    """Sum of per-token cross-entropy over non-ignored targets (flat M)."""
    M = ids.shape[0]
    V, D = table_bf16.shape

    # Row-tile size: big tiles once the problem is real, small tiles at toy
    # sizes so the grid/pipeline path is still exercised.
    TM = 256 if M >= 256 else 8
    num_tiles = pl.cdiv(M, TM)
    M_pad = num_tiles * TM
    pad = M_pad - M

    ids_p = jnp.pad(ids.astype(jnp.int32), (0, pad)).reshape(M_pad, 1)
    tgt_p = jnp.pad(tgt.astype(jnp.int32), (0, pad),
                    constant_values=ignore_index).reshape(M_pad, 1)
    b2 = b_f32.reshape(1, V).astype(jnp.float32)

    partials = pl.pallas_call(
        _fused_ce_kernel,
        out_shape=jax.ShapeDtypeStruct((num_tiles, 8, 128), jnp.float32),
        grid=(num_tiles,),
        in_specs=[
            pl.BlockSpec((TM, 1), lambda i: (i, 0)),    # ids (streamed)
            pl.BlockSpec((TM, 1), lambda i: (i, 0)),    # targets (streamed)
            pl.BlockSpec((V, D), lambda i: (0, 0)),     # emb table (resident)
            pl.BlockSpec((D, V), lambda i: (0, 0)),     # W (resident)
            pl.BlockSpec((1, V), lambda i: (0, 0)),     # b (resident)
        ],
        out_specs=pl.BlockSpec((1, 8, 128), lambda i: (i, 0, 0)),
        compiler_params=pltpu.CompilerParams(
            dimension_semantics=("parallel",),
            vmem_limit_bytes=32 * 1024 * 1024),
    )(ids_p, tgt_p, table_bf16, w_bf16, b2)

    # Finish the reduction over (independent, parallel) per-tile partials.
    return jnp.sum(partials[:, 0, 0])


class AutoregressiveWrapperPallas:
    """JAX/Pallas port of AutoregressiveWrapper.forward with a synthetic net."""

    def __init__(self, num_tokens=256, dim=32, max_seq_len=8,
                 ignore_index=IGNORE_INDEX, pad_value=0, key=None):
        self.ignore_index = ignore_index
        self.pad_value = pad_value
        self.max_seq_len = max_seq_len
        if key is None:
            key = jax.random.PRNGKey(0)
        k_emb, k_w, k_b = jax.random.split(key, 3)
        # deterministic synthetic parameters (f32 masters)
        self.emb_table = jax.random.normal(k_emb, (num_tokens, dim),
                                           jnp.float32) * 0.02
        self.w_out = jax.random.normal(k_w, (dim, num_tokens),
                                       jnp.float32) * 0.02
        self.b_out = jax.random.normal(k_b, (num_tokens,), jnp.float32) * 0.02
        # bf16 copies feed the MXU (halves weight DMA / VMEM residency)
        self.emb_table_bf16 = self.emb_table.astype(jnp.bfloat16)
        self.w_out_bf16 = self.w_out.astype(jnp.bfloat16)

    def forward(self, x):
        # x: (B, N) int32 tokens
        xi = x[:, :-1]                      # (B, N-1) net inputs
        xo = x[:, 1:]                       # (B, N-1) targets
        B, Nm1 = xi.shape
        ids = xi.reshape(B * Nm1)
        tgt = xo.reshape(B * Nm1)

        loss_sum = _cross_entropy_loss_sum_pallas(
            ids, tgt, self.emb_table_bf16, self.w_out_bf16, self.b_out,
            self.ignore_index)

        # Mean over non-ignored targets (matches F.cross_entropy; NaN when all
        # targets are ignore_index, same as PyTorch).
        count = jnp.sum((xo != self.ignore_index).astype(jnp.float32))
        return loss_sum / count

    __call__ = forward


def _reference_loss(model, x):
    """Pure-JAX f32 reference for correctness checking."""
    xi = x[:, :-1]
    xo = x[:, 1:]
    emb = jnp.take(model.emb_table, xi, axis=0)
    logits = emb @ model.w_out + model.b_out            # (B, N-1, V)
    logp = jax.nn.log_softmax(logits, axis=-1)
    picked = jnp.take_along_axis(logp, xo[..., None], axis=-1)[..., 0]
    valid = (xo != model.ignore_index)
    return -(jnp.sum(jnp.where(valid, picked, 0.0)) /
             jnp.sum(valid.astype(jnp.float32)))


if __name__ == "__main__":
    key = jax.random.PRNGKey(0)
    k_tok, k_params = jax.random.split(key)

    B = 2
    N = 9            # so the net sees seq length N-1 = 8 = max_seq_len
    V = 256
    D = 32

    model = AutoregressiveWrapperPallas(num_tokens=V, dim=D, max_seq_len=8,
                                        key=k_params)
    x = jax.random.randint(k_tok, (B, N), 0, V, dtype=jnp.int32)

    loss = model(x)
    loss = jax.block_until_ready(loss)

    ref = jax.block_until_ready(_reference_loss(model, x))
    assert jnp.isfinite(loss), "loss is not finite"
    # bf16 matmul operands (f32 accumulation) vs all-f32 reference
    assert jnp.allclose(loss, ref, rtol=1e-3, atol=1e-3), (loss, ref)

    print("KERNEL_OK")
</pallas_src>

<mosaic_0001>
module attributes {stable_mosaic.version = 11 : i64} {
  func.func @_fused_ce_kernel(%arg0: i32, %arg1: memref<8x1xi32, #tpu.memory_space<vmem>>, %arg2: memref<8x1xi32, #tpu.memory_space<vmem>>, %arg3: memref<256x32xbf16, #tpu.memory_space<vmem>>, %arg4: memref<32x256xbf16, #tpu.memory_space<vmem>>, %arg5: memref<1x256xf32, #tpu.memory_space<vmem>>, %arg6: memref<1x8x128xf32, #tpu.memory_space<vmem>>) attributes {dimension_semantics = [#tpu.dimension_semantics<parallel>], iteration_bounds = array<i64: 2>, scalar_prefetch = 0 : i64, scratch_operands = 0 : i64, tpu.core_type = #tpu.core_type<tc>, window_params = [{transform_indices = @transform_0, window_bounds = array<i64: 8, 1>}, {transform_indices = @transform_1, window_bounds = array<i64: 8, 1>}, {pipeline_mode = #tpu.pipeline_mode<synchronous>, transform_indices = @transform_2, window_bounds = array<i64: 256, 32>}, {pipeline_mode = #tpu.pipeline_mode<synchronous>, transform_indices = @transform_3, window_bounds = array<i64: 32, 256>}, {pipeline_mode = #tpu.pipeline_mode<synchronous>, transform_indices = @transform_4, window_bounds = array<i64: 1, 256>}, {transform_indices = @transform_5, window_bounds = array<i64: 1, 8, 128>}]} {
    %c0 = arith.constant 0 : index
    %c0_0 = arith.constant 0 : index
    %0 = vector.load %arg1[%c0, %c0_0] : memref<8x1xi32, #tpu.memory_space<vmem>>, vector<8x1xi32>
    %c0_1 = arith.constant 0 : index
    %c0_2 = arith.constant 0 : index
    %1 = vector.load %arg2[%c0_1, %c0_2] : memref<8x1xi32, #tpu.memory_space<vmem>>, vector<8x1xi32>
    %2 = tpu.iota {dimensions = array<i32: 1>} : vector<1x256xi32>
    %3 = vector.broadcast %2 : vector<1x256xi32> to vector<8x256xi32>
    %4 = vector.broadcast %0 : vector<8x1xi32> to vector<8x256xi32>
    %5 = arith.cmpi eq, %3, %4 : vector<8x256xi32>
    %6 = arith.extui %5 : vector<8x256xi1> to vector<8x256xi32>
    %7 = arith.sitofp %6 : vector<8x256xi32> to vector<8x256xf32>
    %8 = arith.truncf %7 : vector<8x256xf32> to vector<8x256xbf16>
    %c0_3 = arith.constant 0 : index
    %c0_4 = arith.constant 0 : index
    %9 = vector.load %arg3[%c0_3, %c0_4] : memref<256x32xbf16, #tpu.memory_space<vmem>>, vector<256x32xbf16>
    %cst = arith.constant dense<0.000000e+00> : vector<8x32xf32>
    %10 = tpu.matmul %8, %9, %cst {dimension_numbers = #tpu.dot_dimension_numbers<[1], [0], [0], [1], [0, 0, 1, 1], [], []>} : vector<8x256xbf16>, vector<256x32xbf16>, vector<8x32xf32> -> vector<8x32xf32>
    %11 = arith.truncf %10 : vector<8x32xf32> to vector<8x32xbf16>
    %c0_5 = arith.constant 0 : index
    %c0_6 = arith.constant 0 : index
    %12 = vector.load %arg4[%c0_5, %c0_6] : memref<32x256xbf16, #tpu.memory_space<vmem>>, vector<32x256xbf16>
    %cst_7 = arith.constant dense<0.000000e+00> : vector<8x256xf32>
    %13 = tpu.matmul %11, %12, %cst_7 {dimension_numbers = #tpu.dot_dimension_numbers<[1], [0], [0], [1], [0, 0, 1, 1], [], []>} : vector<8x32xbf16>, vector<32x256xbf16>, vector<8x256xf32> -> vector<8x256xf32>
    %c0_8 = arith.constant 0 : index
    %c0_9 = arith.constant 0 : index
    %14 = vector.load %arg5[%c0_8, %c0_9] : memref<1x256xf32, #tpu.memory_space<vmem>>, vector<1x256xf32>
    %15 = vector.broadcast %14 : vector<1x256xf32> to vector<8x256xf32>
    %16 = arith.addf %13, %15 : vector<8x256xf32>
    %cst_10 = arith.constant dense<0xFF800000> : vector<8xf32>
    %17 = vector.multi_reduction <maximumf>, %16, %cst_10 [1] : vector<8x256xf32> to vector<8xf32>
    %18 = vector.shape_cast %17 : vector<8xf32> to vector<8x1xf32>
    %19 = vector.broadcast %18 : vector<8x1xf32> to vector<8x256xf32>
    %20 = arith.subf %16, %19 : vector<8x256xf32>
    %21 = math.exp %20 : vector<8x256xf32>
    %cst_11 = arith.constant dense<0.000000e+00> : vector<8xf32>
    %22 = vector.multi_reduction <add>, %21, %cst_11 [1] : vector<8x256xf32> to vector<8xf32>
    %23 = vector.shape_cast %22 : vector<8xf32> to vector<8x1xf32>
    %24 = math.log %23 : vector<8x1xf32>
    %25 = vector.broadcast %2 : vector<1x256xi32> to vector<8x256xi32>
    %26 = vector.broadcast %1 : vector<8x1xi32> to vector<8x256xi32>
    %27 = arith.cmpi eq, %25, %26 : vector<8x256xi32>
    %cst_12 = arith.constant 0.000000e+00 : f32
    %28 = vector.broadcast %cst_12 : f32 to vector<8x256xf32>
    %29 = arith.select %27, %20, %28 : vector<8x256xi1>, vector<8x256xf32>
    %cst_13 = arith.constant dense<0.000000e+00> : vector<8xf32>
    %30 = vector.multi_reduction <add>, %29, %cst_13 [1] : vector<8x256xf32> to vector<8xf32>
    %31 = vector.shape_cast %30 : vector<8xf32> to vector<8x1xf32>
    %c-100_i32 = arith.constant -100 : i32
    %32 = vector.broadcast %c-100_i32 : i32 to vector<8x1xi32>
    %33 = arith.cmpi ne, %1, %32 : vector<8x1xi32>
    %34 = arith.subf %24, %31 : vector<8x1xf32>
    %cst_14 = arith.constant 0.000000e+00 : f32
    %35 = vector.broadcast %cst_14 : f32 to vector<8x1xf32>
    %36 = arith.select %33, %34, %35 : vector<8x1xi1>, vector<8x1xf32>
    %37 = vector.shape_cast %36 : vector<8x1xf32> to vector<1x8x1xf32>
    %cst_15 = arith.constant dense<0.000000e+00> : vector<1xf32>
    %38 = vector.multi_reduction <add>, %37, %cst_15 [1, 2] : vector<1x8x1xf32> to vector<1xf32>
    %39 = vector.shape_cast %38 : vector<1xf32> to vector<1x1x1xf32>
    %40 = vector.extract %39[0, 0, 0] : f32 from vector<1x1x1xf32>
    %41 = vector.broadcast %40 : f32 to vector<1x8x128xf32>
    %c0_16 = arith.constant 0 : index
    %c0_17 = arith.constant 0 : index
    %c0_18 = arith.constant 0 : index
    %42 = vector.load %arg6[%c0_16, %c0_17, %c0_18] : memref<1x8x128xf32, #tpu.memory_space<vmem>>, vector<1x8x128xf32>
    tpu.vector_store %arg6[%c0_16, %c0_17, %c0_18], %41 {strides = array<i32>} : memref<1x8x128xf32, #tpu.memory_space<vmem>>, vector<1x8x128xf32>,
    return
  }
  func.func @transform_0(%arg0: i32) -> (i32, i32) {
    %c0_i32 = arith.constant 0 : i32
    %c0_i32_0 = arith.constant 0 : i32
    return %arg0, %c0_i32 : i32, i32
  }
  func.func @transform_1(%arg0: i32) -> (i32, i32) {
    %c0_i32 = arith.constant 0 : i32
    %c0_i32_0 = arith.constant 0 : i32
    return %arg0, %c0_i32 : i32, i32
  }
  func.func @transform_2(%arg0: i32) -> (i32, i32) {
    %c0_i32 = arith.constant 0 : i32
    %c0_i32_0 = arith.constant 0 : i32
    %c0_i32_1 = arith.constant 0 : i32
    return %c0_i32, %c0_i32_0 : i32, i32
  }
  func.func @transform_3(%arg0: i32) -> (i32, i32) {
    %c0_i32 = arith.constant 0 : i32
    %c0_i32_0 = arith.constant 0 : i32
    %c0_i32_1 = arith.constant 0 : i32
    return %c0_i32, %c0_i32_0 : i32, i32
  }
  func.func @transform_4(%arg0: i32) -> (i32, i32) {
    %c0_i32 = arith.constant 0 : i32
    %c0_i32_0 = arith.constant 0 : i32
    %c0_i32_1 = arith.constant 0 : i32
    return %c0_i32, %c0_i32_0 : i32, i32
  }
  func.func @transform_5(%arg0: i32) -> (i32, i32, i32) {
    %c0_i32 = arith.constant 0 : i32
    %c0_i32_0 = arith.constant 0 : i32
    %c0_i32_1 = arith.constant 0 : i32
    return %arg0, %c0_i32, %c0_i32_0 : i32, i32, i32
  }
}

</mosaic_0001>

<llo_original>
// kernel: tpu_custom_call.1
$region0: #{tpu_custom_call.1}
  #allocation0 [shape = 'u32[]', space=smem, size = 0x4, offset = 0x4, fixed_abs, tag = 'smem constant byte address 0x4 - core index']
  #allocation1 [shape = 'u32[72,128]{1,0:T(1,128)}', space=vmem, size = 0x9000, scoped, tag = 'internal scratch']
  %s0 = inlined_call_operand.vmem [shape: s32[16,1], index: 0, kind: input, shape index: {}]
  %s1 = inlined_call_operand.vmem [shape: s32[16,1], index: 1, kind: input, shape index: {}]
  %s2 = inlined_call_operand.vmem [shape: bf16[256,32], index: 2, kind: input, shape index: {}]
  %s3 = inlined_call_operand.vmem [shape: bf16[32,256], index: 3, kind: input, shape index: {}]
  %s4 = inlined_call_operand.vmem [shape: f32[1,256], index: 4, kind: input, shape index: {}]
  %s5 = inlined_call_operand.hbm [shape: f32[2,8,128], index: 5, kind: output, shape index: {}]
  %s6 = sld [smem:[#allocation0]]
  $region53: #{tpu_custom_call.1} parent=0
    _
  %s8 = ssub.s32 1, %s6
  %s9 = scalar_select 0, %s8, %s6
  $region1: #{tpu_custom_call.1} parent=0
    #allocation2 [shape = 'u8[8192]{0}', space=vmem, size = 0x2000, scoped, tag = 'output window, operand 0']
    #allocation3 [shape = 's32[2]{0}', space=sflag, size = 0x8, scoped, tag = 'scoped memory for tpu_custom_call.1']
    %10 = vsyncpa [#allocation3], 0
    %s11 = scalar_lea.sflag [#allocation3], 1
    %12 = vsyncpa %s11, 0
    loop: start=0, step=1, limit=4
    $region2: #{tpu_custom_call.1} parent=1 // loop_pre_header
      _
    $region3: #{tpu_custom_call.1} parent=1 // loop_header
      %s14 = sphi 0, %s18
      %p15 = scmp.ge.s32.totalorder %s14, 4
      %s24 = sphi 0, %s26
      %s27 = sphi 0, %s24
      %s28 = sphi 0, %s27
      %s44 = sphi 0, %s28
      %s50 = sphi 0, %s52
      %s53 = sphi 0, %s50
      %s54 = sphi 0, %s53
      %s70 = sphi 0, %s54
      %s74 = sphi 0, %s74
      %s76 = sphi 0, %s74
      %s77 = sphi 0, %s76
      %s91 = sphi 0, %s77
      %s95 = sphi 0, %s95
      %s97 = sphi 0, %s95
      %s98 = sphi 0, %s97
      %s112 = sphi 0, %s98
      %s116 = sphi 0, %s116
      %s118 = sphi 0, %s116
      %s119 = sphi 0, %s118
      %s133 = sphi 0, %s119
      %s139 = sphi 0, %s141
      %s142 = sphi 0, %s139
      %s143 = sphi 0, %s142
      %s159 = sphi 0, %s143
    $region4: #{tpu_custom_call.1} parent=1 // loop_header_branch
      %17 = sbr.rel (%p15) target = $region8
    $region5: #{tpu_custom_call.1} parent=1 // loop_body
      %s19 = ssub.s32 %s14, 1
      %s20 = ssub.s32 %s14, 2
      %s21 = sadd.s32 %s14, 1
      %s22 = ssub.s32 %s14, %s21
      %p23 = scmp.eq.s32.totalorder %s22, 0
      %s25 = sadd.s32 %s24, 1
      %s26 = scalar_select %p23, %s24, %s25
      %p29 = pneg %p23
      %p30 = scmp.eq.s32.totalorder %s14, 1
      %p31 = por %p29, %p30
      %p32 = scmp.ne.s32.totalorder %s24, %s27
      %p33 = scmp.eq.s32.totalorder %s14, 0
      %p34 = por %p32, %p33
      %p35 = scmp.ne.s32.totalorder %s24, %s27
      %p36 = scmp.eq.s32.totalorder %s19, 1
      %p37 = por %p35, %p36
      %p38 = scmp.ne.s32.totalorder %s27, %s28
      %p39 = scmp.eq.s32.totalorder %s19, 0
      %p40 = por %p38, %p39
      %p41 = scmp.ne.s32.totalorder %s27, %s28
      %p42 = scmp.eq.s32.totalorder %s20, 1
      %p43 = por %p41, %p42
      %p45 = scmp.ne.s32.totalorder %s28, %s44
      %p46 = scmp.eq.s32.totalorder %s20, 0
      %p47 = por %p45, %p46
      %s48 = ssub.s32 %s14, %s21
      %p49 = scmp.eq.s32.totalorder %s48, 0
      %s51 = sadd.s32 %s50, 1
      %s52 = scalar_select %p49, %s50, %s51
      %p55 = pneg %p49
      %p56 = scmp.eq.s32.totalorder %s14, 1
      %p57 = por %p55, %p56
      %p58 = scmp.ne.s32.totalorder %s50, %s53
      %p59 = scmp.eq.s32.totalorder %s14, 0
      %p60 = por %p58, %p59
      %p61 = scmp.ne.s32.totalorder %s50, %s53
      %p62 = scmp.eq.s32.totalorder %s19, 1
      %p63 = por %p61, %p62
      %p64 = scmp.ne.s32.totalorder %s53, %s54
      %p65 = scmp.eq.s32.totalorder %s19, 0
      %p66 = por %p64, %p65
      %p67 = scmp.ne.s32.totalorder %s53, %s54
      %p68 = scmp.eq.s32.totalorder %s20, 1
      %p69 = por %p67, %p68
      %p71 = scmp.ne.s32.totalorder %s54, %s70
      %p72 = scmp.eq.s32.totalorder %s20, 0
      %p73 = por %p71, %p72
      %s75 = sadd.s32 %s74, 1
      %p78 = scmp.eq.s32.totalorder %s14, 1
      %p79 = scmp.ne.s32.totalorder %s74, %s76
      %p80 = scmp.eq.s32.totalorder %s14, 0
      %p81 = por %p79, %p80
      %p82 = scmp.ne.s32.totalorder %s74, %s76
      %p83 = scmp.eq.s32.totalorder %s19, 1
      %p84 = por %p82, %p83
      %p85 = scmp.ne.s32.totalorder %s76, %s77
      %p86 = scmp.eq.s32.totalorder %s19, 0
      %p87 = por %p85, %p86
      %p88 = scmp.ne.s32.totalorder %s76, %s77
      %p89 = scmp.eq.s32.totalorder %s20, 1
      %p90 = por %p88, %p89
      %p92 = scmp.ne.s32.totalorder %s77, %s91
      %p93 = scmp.eq.s32.totalorder %s20, 0
      %p94 = por %p92, %p93
      %s96 = sadd.s32 %s95, 1
      %p99 = scmp.eq.s32.totalorder %s14, 1
      %p100 = scmp.ne.s32.totalorder %s95, %s97
      %p101 = scmp.eq.s32.totalorder %s14, 0
      %p102 = por %p100, %p101
      %p103 = scmp.ne.s32.totalorder %s95, %s97
      %p104 = scmp.eq.s32.totalorder %s19, 1
      %p105 = por %p103, %p104
      %p106 = scmp.ne.s32.totalorder %s97, %s98
      %p107 = scmp.eq.s32.totalorder %s19, 0
      %p108 = por %p106, %p107
      %p109 = scmp.ne.s32.totalorder %s97, %s98
      %p110 = scmp.eq.s32.totalorder %s20, 1
      %p111 = por %p109, %p110
      %p113 = scmp.ne.s32.totalorder %s98, %s112
      %p114 = scmp.eq.s32.totalorder %s20, 0
      %p115 = por %p113, %p114
      %s117 = sadd.s32 %s116, 1
      %p120 = scmp.eq.s32.totalorder %s14, 1
      %p121 = scmp.ne.s32.totalorder %s116, %s118
      %p122 = scmp.eq.s32.totalorder %s14, 0
      %p123 = por %p121, %p122
      %p124 = scmp.ne.s32.totalorder %s116, %s118
      %p125 = scmp.eq.s32.totalorder %s19, 1
      %p126 = por %p124, %p125
      %p127 = scmp.ne.s32.totalorder %s118, %s119
      %p128 = scmp.eq.s32.totalorder %s19, 0
      %p129 = por %p127, %p128
      %p130 = scmp.ne.s32.totalorder %s118, %s119
      %p131 = scmp.eq.s32.totalorder %s20, 1
      %p132 = por %p130, %p131
      %p134 = scmp.ne.s32.totalorder %s119, %s133
      %p135 = scmp.eq.s32.totalorder %s20, 0
      %p136 = por %p134, %p135
      %s137 = ssub.s32 %s14, %s21
      %p138 = scmp.eq.s32.totalorder %s137, 0
      %s140 = sadd.s32 %s139, 1
      %s141 = scalar_select %p138, %s139, %s140
      %p144 = pneg %p138
      %p145 = scmp.eq.s32.totalorder %s14, 1
      %p146 = por %p144, %p145
      %p147 = scmp.ne.s32.totalorder %s139, %s142
      %p148 = scmp.eq.s32.totalorder %s14, 0
      %p149 = por %p147, %p148
      %p150 = scmp.ne.s32.totalorder %s139, %s142
      %p151 = scmp.eq.s32.totalorder %s19, 1
      %p152 = por %p150, %p151
      %p153 = scmp.ne.s32.totalorder %s142, %s143
      %p154 = scmp.eq.s32.totalorder %s19, 0
      %p155 = por %p153, %p154
      %p156 = scmp.ne.s32.totalorder %s142, %s143
      %p157 = scmp.eq.s32.totalorder %s20, 1
      %p158 = por %p156, %p157
      %p160 = scmp.ne.s32.totalorder %s143, %s159
      %p161 = scmp.eq.s32.totalorder %s20, 0
      %p162 = por %p160, %p161
      %p163 = scmp.le.s32.totalorder 1, %s14
      %p164 = scmp.lt.s32.totalorder %s14, 3
      %p165 = pnand %p163, %p164
      %p166 = pneg %p165
      // Predicated region
      $region9: #{tpu_custom_call.1} parent=5 // pred_check
        _
      $region10: #{tpu_custom_call.1} parent=5 // pred_check_branch
        %168 = sbr.rel (%p165) target = $region12
      $region11: #{tpu_custom_call.1} parent=5 // pred_region
        %s169 = ssub.s32 %s14, 1
        // Predicated region
        $region13: #{tpu_custom_call.1} parent=11 // pred_check
          %p170 = pneg %p87
        $region14: #{tpu_custom_call.1} parent=11 // pred_check_branch
          %172 = sbr.rel (%p170) target = $region16
        $region15: #{tpu_custom_call.1} parent=11 // pred_region
          _
        $region16: #{tpu_custom_call.1} parent=11 // pred_fallthru
          _
        // Predicated region
        $region17: #{tpu_custom_call.1} parent=11 // pred_check
          %p173 = pneg %p108
        $region18: #{tpu_custom_call.1} parent=11 // pred_check_branch
          %175 = sbr.rel (%p173) target = $region20
        $region19: #{tpu_custom_call.1} parent=11 // pred_region
          _
        $region20: #{tpu_custom_call.1} parent=11 // pred_fallthru
          _
        // Predicated region
        $region21: #{tpu_custom_call.1} parent=11 // pred_check
          %p176 = pneg %p129
        $region22: #{tpu_custom_call.1} parent=11 // pred_check_branch
          %178 = sbr.rel (%p176) target = $region24
        $region23: #{tpu_custom_call.1} parent=11 // pred_region
          _
        $region24: #{tpu_custom_call.1} parent=11 // pred_fallthru
          _
      $region12: #{tpu_custom_call.1} parent=5 // pred_fallthru
        _
      %p179 = scmp.lt.s32.totalorder %s14, 2
      // Predicated region
      $region25: #{tpu_custom_call.1} parent=5 // pred_check
        %p180 = pneg %p179
      $region26: #{tpu_custom_call.1} parent=5 // pred_check_branch
        %182 = sbr.rel (%p180) target = $region28
      $region27: #{tpu_custom_call.1} parent=5 // pred_region
        // Predicated region
        $region29: #{tpu_custom_call.1} parent=27 // pred_check
          %p183 = pneg %p34
        $region30: #{tpu_custom_call.1} parent=27 // pred_check_branch
          %185 = sbr.rel (%p183) target = $region32
        $region31: #{tpu_custom_call.1} parent=27 // pred_region
          %p186 = scmp.lt.s32.totalorder %s14, 1
          %s187 = scalar_select %p186, %s14, 1
          %s188 = smul.addr %s187, 8
          %s189 = scalar_lea.vmem %s0, %s188
        $region32: #{tpu_custom_call.1} parent=27 // pred_fallthru
          _
        // Predicated region
        $region33: #{tpu_custom_call.1} parent=27 // pred_check
          %p190 = pneg %p60
        $region34: #{tpu_custom_call.1} parent=27 // pred_check_branch
          %192 = sbr.rel (%p190) target = $region36
        $region35: #{tpu_custom_call.1} parent=27 // pred_region
          %p193 = scmp.lt.s32.totalorder %s14, 1
          %s194 = scalar_select %p193, %s14, 1
          %s195 = smul.addr %s194, 8
          %s196 = scalar_lea.vmem %s1, %s195
        $region36: #{tpu_custom_call.1} parent=27 // pred_fallthru
          _
      $region28: #{tpu_custom_call.1} parent=5 // pred_fallthru
        _
      %p197 = scmp.le.s32.totalorder 1, %s14
      %p198 = scmp.lt.s32.totalorder %s14, 3
      %p199 = pnand %p197, %p198
      %p200 = pneg %p199
      // Predicated region
      $region37: #{tpu_custom_call.1} parent=5 // pred_check
        _
      $region38: #{tpu_custom_call.1} parent=5 // pred_check_branch
        %202 = sbr.rel (%p199) target = $region40
      $region39: #{tpu_custom_call.1} parent=5 // pred_region
        %s203 = ssub.s32 %s14, 1
        %p204 = scmp.lt.s32.totalorder %s19, 1
        %s205 = scalar_select %p204, %s19, 1
        %s206 = smul.addr %s205, 8
        %s207 = scalar_lea.vmem %s0, %s206
        %p208 = pneg %p40
        %p209 = pneg %p37
        %p210 = scmp.lt.s32.totalorder %s19, 1
        %s211 = scalar_select %p210, %s19, 1
        %s212 = smul.addr %s211, 8
        %s213 = scalar_lea.vmem %s1, %s212
        %p214 = pneg %p66
        %p215 = pneg %p63
        %p216 = pneg %p87
        %p217 = pneg %p84
        %p218 = pneg %p108
        %p219 = pneg %p105
        %p220 = pneg %p129
        %p221 = pneg %p126
        %p222 = pneg %p155
        %p223 = pneg %p152
        %s224 = sand.u32 %s142, 1
        %s225 = scalar_lea.sflag [#allocation3], %s224
        %s226 = sand.u32 %s142, 1
        %s227 = smul.addr %s226, 8
        %s228 = scalar_lea.vmem [#allocation2], %s227
        %p229 = scmp.lt.s32.totalorder %s19, 1
        %s230 = scalar_select %p229, %s19, 1
        %s231 = smul.addr %s230, 8
        %s232 = scalar_lea.vmem %s0, %s231
        %p233 = scmp.lt.s32.totalorder %s19, 1
        %s234 = scalar_select %p233, %s19, 1
        %s235 = smul.addr %s234, 8
        %s236 = scalar_lea.vmem %s1, %s235
        %v238 = vld [vmem:[%s232] sm:$0xff]
        %v239 = vld [vmem:[%s236] sm:$0xff]
        %v240 = vlaneseq
        %v241 = vand.u32 %v240, 127
        %v242 = vadd.s32 %v241, 128
        %243 = vset.pattern.permute.xlu0 0
        %244 = vperm.xlu0 %243, %v238
        %v245 = vpop.permute.xlu0 %244
        %vm246 = vcmp.eq.s32.totalorder %v241, %v245
        %vm247 = vcmp.eq.s32.totalorder %v242, %v245
        %v248 = vsel %vm246, 1, 0
        %v249 = vsel %vm247, 1, 0
        %v250 = vcvt.s32.f32 %v248
        %v251 = vcvt.s32.f32 %v249
        %v252 = vpack.c.bf16 %v250, %v250
        %v253 = vpack.c.bf16 %v251, %v251
        %v254 = vld [vmem:[%s2] sm:$0xf]
        %v255 = vld [vmem:[%s2 + $0x4] sm:$0xf]
        %v256 = vld [vmem:[%s2 + $0x8] sm:$0xf]
        %v257 = vld [vmem:[%s2 + $0xc] sm:$0xf]
        %v258 = vld [vmem:[%s2 + $0x10] sm:$0xf]
        %v259 = vld [vmem:[%s2 + $0x14] sm:$0xf]
        %v260 = vld [vmem:[%s2 + $0x18] sm:$0xf]
        %v261 = vld [vmem:[%s2 + $0x1c] sm:$0xf]
        %v262 = vld [vmem:[%s2 + $0x20] sm:$0xf]
        %v263 = vld [vmem:[%s2 + $0x24] sm:$0xf]
        %v264 = vld [vmem:[%s2 + $0x28] sm:$0xf]
        %v265 = vld [vmem:[%s2 + $0x2c] sm:$0xf]
        %v266 = vld [vmem:[%s2 + $0x30] sm:$0xf]
        %v267 = vld [vmem:[%s2 + $0x34] sm:$0xf]
        %v268 = vld [vmem:[%s2 + $0x38] sm:$0xf]
        %v269 = vld [vmem:[%s2 + $0x3c] sm:$0xf]
        %v270 = vld [vmem:[%s2 + $0x40] sm:$0xf]
        %v271 = vld [vmem:[%s2 + $0x44] sm:$0xf]
        %v272 = vld [vmem:[%s2 + $0x48] sm:$0xf]
        %v273 = vld [vmem:[%s2 + $0x4c] sm:$0xf]
        %v274 = vld [vmem:[%s2 + $0x50] sm:$0xf]
        %v275 = vld [vmem:[%s2 + $0x54] sm:$0xf]
        %v276 = vld [vmem:[%s2 + $0x58] sm:$0xf]
        %v277 = vld [vmem:[%s2 + $0x5c] sm:$0xf]
        %v278 = vld [vmem:[%s2 + $0x60] sm:$0xf]
        %v279 = vld [vmem:[%s2 + $0x64] sm:$0xf]
        %v280 = vld [vmem:[%s2 + $0x68] sm:$0xf]
        %v281 = vld [vmem:[%s2 + $0x6c] sm:$0xf]
        %v282 = vld [vmem:[%s2 + $0x70] sm:$0xf]
        %v283 = vld [vmem:[%s2 + $0x74] sm:$0xf]
        %v284 = vld [vmem:[%s2 + $0x78] sm:$0xf]
        %v285 = vld [vmem:[%s2 + $0x7c] sm:$0xf]
        %v318 = vunpack.c.l.b16 %v254
        %v319 = vunpack.c.l.b16 %v255
        %v320 = vunpack.c.l.b16 %v256
        %v321 = vunpack.c.l.b16 %v257
        %v322 = vunpack.c.l.b16 %v258
        %v323 = vunpack.c.l.b16 %v259
        %v324 = vunpack.c.l.b16 %v260
        %v325 = vunpack.c.l.b16 %v261
        %v326 = vunpack.c.l.b16 %v262
        %v327 = vunpack.c.l.b16 %v263
        %v328 = vunpack.c.l.b16 %v264
        %v329 = vunpack.c.l.b16 %v265
        %v330 = vunpack.c.l.b16 %v266
        %v331 = vunpack.c.l.b16 %v267
        %v332 = vunpack.c.l.b16 %v268
        %v333 = vunpack.c.l.b16 %v269
        %v334 = vunpack.c.l.b16 %v270
        %v335 = vunpack.c.l.b16 %v271
        %v336 = vunpack.c.l.b16 %v272
        %v337 = vunpack.c.l.b16 %v273
        %v338 = vunpack.c.l.b16 %v274
        %v339 = vunpack.c.l.b16 %v275
        %v340 = vunpack.c.l.b16 %v276
        %v341 = vunpack.c.l.b16 %v277
        %v342 = vunpack.c.l.b16 %v278
        %v343 = vunpack.c.l.b16 %v279
        %v344 = vunpack.c.l.b16 %v280
        %v345 = vunpack.c.l.b16 %v281
        %v346 = vunpack.c.l.b16 %v282
        %v347 = vunpack.c.l.b16 %v283
        %v348 = vunpack.c.l.b16 %v284
        %v349 = vunpack.c.l.b16 %v285
        %v350 = vpack.c.b16 %v319, %v318
        %v351 = vpack.c.b16 %v321, %v320
        %v352 = vpack.c.b16 %v323, %v322
        %v353 = vpack.c.b16 %v325, %v324
        %v354 = vpack.c.b16 %v327, %v326
        %v355 = vpack.c.b16 %v329, %v328
        %v356 = vpack.c.b16 %v331, %v330
        %v357 = vpack.c.b16 %v333, %v332
        %v358 = vpack.c.b16 %v335, %v334
        %v359 = vpack.c.b16 %v337, %v336
        %v360 = vpack.c.b16 %v339, %v338
        %v361 = vpack.c.b16 %v341, %v340
        %v362 = vpack.c.b16 %v343, %v342
        %v363 = vpack.c.b16 %v345, %v344
        %v364 = vpack.c.b16 %v347, %v346
        %v365 = vpack.c.b16 %v349, %v348
        %382 = vmatpush.bf16.msra.mxu0 %v357
        %383 = vmatpush.bf16.msra.mxu0 %v356
        %384 = vmatpush.bf16.msra.mxu0 %v355
        %385 = vmatpush.bf16.msra.mxu0 %v354
        %386 = vmatpush.bf16.msra.mxu0 %v353
        %387 = vmatpush.bf16.msra.mxu0 %v352
        %388 = vmatpush.bf16.msra.mxu0 %v351
        %389 = vmatpush.bf16.msra.mxu0 %v350
        %390 = vmatmul.bf16.gmra.mxu0 %v252
        %v391 = vpop.f32.mrf.mxu0
        %v392 = vadd.f32 0.0, %v391
        %v393 = vpop.f32.mrf.mxu0
        %394 = vdwg.mxu0
        %395 = vmatpush.bf16.msra.mxu0 %v365
        %396 = vmatpush.bf16.msra.mxu0 %v364
        %397 = vmatpush.bf16.msra.mxu0 %v363
        %398 = vmatpush.bf16.msra.mxu0 %v362
        %399 = vmatpush.bf16.msra.mxu0 %v361
        %400 = vmatpush.bf16.msra.mxu0 %v360
        %401 = vmatpush.bf16.msra.mxu0 %v359
        %402 = vmatpush.bf16.msra.mxu0 %v358
        %403 = vmatmul.bf16.gmra.mxu0 %v253
        %v404 = vpop.f32.mrf.mxu0
        %v405 = vadd.f32 %v392, %v404
        %v406 = vpop.f32.mrf.mxu0
        %407 = vdwg.mxu0
        %v408 = vpack.c.bf16 %v405, %v405
        %v409 = vld [vmem:[%s3] sm:$0xff]
        %v410 = vld [vmem:[%s3 + $0x8] sm:$0xff]
        %v411 = vld [vmem:[%s3 + $0x10] sm:$0xff]
        %v412 = vld [vmem:[%s3 + $0x18] sm:$0xff]
        %v413 = vld [vmem:[%s4] sm:$0x3]
        %v415 = vperm.slane %v413, 0
        %v416 = vperm.slane %v413, 1
        %v423 = vunpack.c.l.b16 %v409
        %v424 = vunpack.c.h.b16 %v409
        %v425 = vunpack.c.l.b16 %v410
        %v426 = vunpack.c.h.b16 %v410
        %v427 = vunpack.c.l.b16 %v411
        %v428 = vunpack.c.h.b16 %v411
        %v429 = vunpack.c.l.b16 %v412
        %v430 = vunpack.c.h.b16 %v412
        %v431 = vpack.c.b16 %v425, %v423
        %v432 = vpack.c.b16 %v426, %v424
        %v433 = vpack.c.b16 %v429, %v427
        %v434 = vpack.c.b16 %v430, %v428
        %vm439 = vcmask 261120
        %v441 = vsel %vm439, %v408, 0
        %443 = vmatpush.bf16.msra.mxu0 0
        %444 = vmatpush.bf16.msra.mxu0 0
        %445 = vmatpush.bf16.msra.mxu0 0
        %446 = vmatpush.bf16.msra.mxu0 0
        %447 = vmatpush.bf16.msra.mxu0 0
        %448 = vmatpush.bf16.msra.mxu0 0
        %449 = vmatpush.bf16.msra.mxu0 %v433
        %450 = vmatpush.bf16.msra.mxu0 %v431
        %451 = vmatmul.bf16.gmra.mxu0 %v441
        %v452 = vpop.f32.mrf.mxu0
        %v453 = vadd.f32 %v415, %v452
        %v454 = vpop.f32.mrf.mxu0
        %455 = vdwg.mxu0
        %456 = vmatpush.bf16.msra.mxu0 0
        %457 = vmatpush.bf16.msra.mxu0 0
        %458 = vmatpush.bf16.msra.mxu0 0
        %459 = vmatpush.bf16.msra.mxu0 0
        %460 = vmatpush.bf16.msra.mxu0 0
        %461 = vmatpush.bf16.msra.mxu0 0
        %462 = vmatpush.bf16.msra.mxu0 %v434
        %463 = vmatpush.bf16.msra.mxu0 %v432
        %464 = vmatmul.bf16.gmra.mxu0 %v441
        %v465 = vpop.f32.mrf.mxu0
        %v466 = vadd.f32 %v416, %v465
        %v467 = vpop.f32.mrf.mxu0
        %468 = vdwg.mxu0
        %v469 = vmax.f32 %v453, %v466
        %470 = vmax.xlane.f32.xlu0 %v469
        %v471 = vpop.xlane.xlu0 %470
        %v472 = vsub.f32 %v453, %v471
        %v473 = vsub.f32 %v466, %v471
        %v474 = vmul.f32 %v472, 1.442695
        %v475 = vpow.pop %v474
        %v476 = vmul.f32 %v473, 1.442695
        %v477 = vpow.pop %v476
        %v478 = vadd.f32 %v475, %v477
        %479 = vadd.xlane.f32.xlu0 %v478
        %v480 = vpop.xlane.xlu0 %479
        %v481 = vlog2.pop %v480
        %v482 = vmul.f32 %v481, 0.6931472
        %483 = vset.pattern.permute.xlu0 0
        %484 = vperm.xlu0 %483, %v239
        %v485 = vpop.permute.xlu0 %484
        %vm486 = vcmp.eq.s32.totalorder %v241, %v485
        %vm487 = vcmp.eq.s32.totalorder %v242, %v485
        %v488 = vsel %vm486, %v472, 0.0
        %v489 = vsel %vm487, %v473, 0.0
        %v490 = vadd.f32 %v488, %v489
        %491 = vadd.xlane.f32.xlu0 %v490
        %v492 = vpop.xlane.xlu0 %491
        %vm493 = vcmp.ne.s32.totalorder %v239, 4294967196
        %v494 = vsub.f32 %v482, %v492
        %v495 = vsel %vm493, %v494, 0.0
        %vm496 = vcmask 7168
        %v497 = vsel %vm496, %v495, 0.0
        %498 = vadd.xlane.f32.xlu0 %v497
        %v499 = vpop.xlane.xlu0 %498
        %v500 = vrot.slane %v499, 4
        %v501 = vadd.f32 %v499, %v500
        %v502 = vrot.slane %v501, 2
        %v503 = vadd.f32 %v501, %v502
        %v504 = vrot.slane %v503, 1
        %v505 = vadd.f32 %v503, %v504
        %s506 = vtos %v505
        %v507 = vstv %s506
        %508 = vst [vmem:[%s228] sm:$0xff] %v507
        %s509 = sand.u32 %s142, 1
        %s510 = scalar_lea.sflag [#allocation3], %s509
        %s511 = sand.u32 %s142, 1
        %s512 = smul.addr %s511, 8
        %s513 = scalar_lea.vmem [#allocation2], %s512
        // Predicated region
        $region41: #{tpu_custom_call.1} parent=39 // pred_check
          %p514 = pneg %p152
        $region42: #{tpu_custom_call.1} parent=39 // pred_check_branch
          %516 = sbr.rel (%p514) target = $region44
        $region43: #{tpu_custom_call.1} parent=39 // pred_region
          %518 = vsyncadd %s510, 0
          %s519 = smul.addr %s19, 8
          %s520 = scalar_lea.hbm %s5, %s519
          %s522 = sshll.u32 %s513, 4
          %s523 = int_to_ptr.vmem [resolvable:$true] %s522
          %s524 = sshll.u32 %s520, 4
          %s525 = int_to_ptr.hbm [resolvable:$true] %s524
          %527 = dma.vmem_to_hbm [thread:$0]  %s523, 128, %s525, %s510
        $region44: #{tpu_custom_call.1} parent=39 // pred_fallthru
          _
      $region40: #{tpu_custom_call.1} parent=5 // pred_fallthru
        _
      %p528 = scmp.le.s32.totalorder 2, %s14
      // Predicated region
      $region45: #{tpu_custom_call.1} parent=5 // pred_check
        %p529 = pneg %p528
      $region46: #{tpu_custom_call.1} parent=5 // pred_check_branch
        %531 = sbr.rel (%p529) target = $region48
      $region47: #{tpu_custom_call.1} parent=5 // pred_region
        %s532 = ssub.s32 %s14, 2
        // Predicated region
        $region49: #{tpu_custom_call.1} parent=47 // pred_check
          %p533 = pneg %p158
        $region50: #{tpu_custom_call.1} parent=47 // pred_check_branch
          %535 = sbr.rel (%p533) target = $region52
        $region51: #{tpu_custom_call.1} parent=47 // pred_region
          %s536 = sand.u32 %s143, 1
          %s537 = scalar_lea.sflag [#allocation3], %s536
          %s538 = sand.u32 %s143, 1
          %s539 = smul.addr %s538, 8
          %s540 = scalar_lea.vmem [#allocation2], %s539
          %542 = dma.done %s537, 128
        $region52: #{tpu_custom_call.1} parent=47 // pred_fallthru
          _
      $region48: #{tpu_custom_call.1} parent=5 // pred_fallthru
        _
    $region6: #{tpu_custom_call.1} parent=1 // loop_footer
      %s18 = sadd.s32 1, %s14
    $region7: #{tpu_custom_call.1} parent=1 // loop_footer_branch
      %13 = sbr.rel target = $region3
    $region8: #{tpu_custom_call.1} parent=1 // loop_exit
      _
    %543 = vsyncpa [#allocation3], 1
    %s544 = scalar_lea.sflag [#allocation3], 1
    %545 = vsyncpa %s544, 1

</llo_original>
